<compile_context>
chip_gen: v5e
topology: v5e:2x2
jax: 0.10.0
libtpu: 0.0.40
codegen_flags: <defaults>
</compile_context>

<pallas_src>
import functools

import jax
import jax.numpy as jnp
from jax.experimental import pallas as pl
from jax.experimental.pallas import tpu as pltpu


def _stable_softplus(x):
    # softplus(x) = max(x, 0) + log1p(exp(-|x|)); never overflows.
    return jnp.maximum(x, 0.0) + jnp.log1p(jnp.exp(-jnp.abs(x)))


# -----------------------------------------------------------------------------
# Fused kernel (one grid step = one Monte-Carlo sample s):
#   W1aug = mean1 + sum_r z[s,r] * cov1[r]        (VPU FMAs, z[s,r] from SMEM)
#   W2aug = mean2 + sum_r z[s,r] * cov2[r]
#   h     = relu(x_aug @ W1aug)                   (bias folded via ones column)
#   pred  = h @ W2aug[:hidden] + W2aug[hidden]    (MXU + broadcast bias row)
#   loss[s] = mean((pred - y)^2)                  (scalar -> SMEM)
# -----------------------------------------------------------------------------
def _vi_fused_kernel(
    z_ref,                                    # SMEM (S, rank) scalar-prefetch
    cov1_ref, cov2_ref, mean1_ref, mean2_ref,  # VMEM, resident across samples
    x_ref, y_ref,                              # VMEM, resident across samples
    loss_ref,                                  # SMEM (1, 1) block for sample s
    *, rank, hidden, inv_n,
):
    s = pl.program_id(0)

    # --- subspace projection fused with set_weights (bias rows folded in) ---
    w1 = mean1_ref[...]                       # (d_in+1, hidden)
    w2 = mean2_ref[...]                       # (hidden+1, d_out)
    for r in range(rank):                     # unrolled; rank == 8
        zr = z_ref[s, r]                      # SMEM scalar -> sreg splat
        w1 = w1 + zr * cov1_ref[r]
        w2 = w2 + zr * cov2_ref[r]

    # --- base model forward (2-layer MLP) + MSE loss -------------------------
    x = x_ref[...]                            # (B, d_in+1); last column is 1.0
    h = jnp.maximum(jnp.dot(x, w1, preferred_element_type=jnp.float32), 0.0)
    pred = (jnp.dot(h, w2[:hidden, :], preferred_element_type=jnp.float32)
            + w2[hidden:, :])                 # bias row broadcast
    diff = pred - y_ref[...]
    loss_ref[0, 0] = jnp.sum(diff * diff) * inv_n


# -----------------------------------------------------------------------------
# Jitted wrapper. All "set_weights"-style glue (flat subspace basis -> per-layer
# bias-folded slabs) and the reparameterization live here; the kernel only sees
# dense VMEM slabs + an SMEM z table.
# -----------------------------------------------------------------------------
@functools.partial(jax.jit, static_argnames=("dims", "eps"))
def vi_model_forward_sampled(
    x, y,
    inv_softplus_sigma, mu, noise,            # noise: (S, rank)
    cov_factor, subspace_mean,
    *, dims, eps=1e-6,
):
    d_in, hidden, d_out = dims
    rank = inv_softplus_sigma.shape[0]
    S = noise.shape[0]
    B = x.shape[0]

    n_w1, n_b1, n_w2, n_b2 = d_in * hidden, hidden, hidden * d_out, d_out
    num_params = n_w1 + n_b1 + n_w2 + n_b2
    assert cov_factor.shape == (rank, num_params)
    assert subspace_mean.shape == (num_params,)
    assert noise.shape == (S, rank)

    # --- reparameterization (tiny; fuses into surrounding XLA) --------------
    sigma = _stable_softplus(inv_softplus_sigma) + eps            # (rank,)
    z = mu[None, :] + noise * sigma[None, :]                      # (S, rank)
    z = z.astype(jnp.float32)

    # --- split flat basis per layer and fold biases into the weight slabs ---
    # Flat packing order: W1 row-major (d_in, hidden), b1, W2 (hidden, d_out),
    # b2 — matching the pure-JAX reference below.
    # TODO(synk): torch.nn.Linear stores weights as (out_features, in_features);
    # a faithful PyTorch set_weights packing may require transposing the W
    # blocks before folding.
    o1, o2, o3 = n_w1, n_w1 + n_b1, n_w1 + n_b1 + n_w2
    cov1 = jnp.concatenate(
        [cov_factor[:, :o1].reshape(rank, d_in, hidden),
         cov_factor[:, o1:o2].reshape(rank, 1, hidden)], axis=1)   # (r, d_in+1, h)
    cov2 = jnp.concatenate(
        [cov_factor[:, o2:o3].reshape(rank, hidden, d_out),
         cov_factor[:, o3:].reshape(rank, 1, d_out)], axis=1)      # (r, h+1, d_out)
    mean1 = jnp.concatenate(
        [subspace_mean[:o1].reshape(d_in, hidden),
         subspace_mean[o1:o2].reshape(1, hidden)], axis=0)         # (d_in+1, h)
    mean2 = jnp.concatenate(
        [subspace_mean[o2:o3].reshape(hidden, d_out),
         subspace_mean[o3:].reshape(1, d_out)], axis=0)            # (h+1, d_out)
    x_aug = jnp.concatenate(
        [x, jnp.ones((B, 1), x.dtype)], axis=1)                    # (B, d_in+1)

    # --- cost estimate (lets XLA overlap this tiny call) ---------------------
    num_aug = (d_in + 1) * hidden + (hidden + 1) * d_out
    flops = S * (2 * rank * num_aug
                 + 2 * B * (d_in + 1) * hidden
                 + 2 * B * hidden * d_out
                 + 3 * B * d_out)
    bytes_accessed = 4 * ((rank + 1) * num_aug + B * (d_in + 1 + d_out)
                          + S * rank + S)
    cost = pl.CostEstimate(flops=flops, transcendentals=0,
                           bytes_accessed=bytes_accessed)

    kernel = functools.partial(
        _vi_fused_kernel, rank=rank, hidden=hidden, inv_n=1.0 / float(B * d_out))

    vmem = pltpu.MemorySpace.VMEM
    losses = pl.pallas_call(
        kernel,
        out_shape=jax.ShapeDtypeStruct((S, 1), jnp.float32),
        grid_spec=pltpu.PrefetchScalarGridSpec(
            num_scalar_prefetch=1,                       # z -> SMEM
            grid=(S,),
            in_specs=[
                # cov/mean/x/y: constant index_map -> resident across samples.
                pl.BlockSpec((rank, d_in + 1, hidden), lambda s, z: (0, 0, 0),
                             memory_space=vmem),
                pl.BlockSpec((rank, hidden + 1, d_out), lambda s, z: (0, 0, 0),
                             memory_space=vmem),
                pl.BlockSpec((d_in + 1, hidden), lambda s, z: (0, 0),
                             memory_space=vmem),
                pl.BlockSpec((hidden + 1, d_out), lambda s, z: (0, 0),
                             memory_space=vmem),
                pl.BlockSpec((B, d_in + 1), lambda s, z: (0, 0),
                             memory_space=vmem),
                pl.BlockSpec((B, d_out), lambda s, z: (0, 0),
                             memory_space=vmem),
            ],
            # Scalar loss per sample goes straight to SMEM.
            out_specs=pl.BlockSpec((1, 1), lambda s, z: (s, 0),
                                   memory_space=pltpu.MemorySpace.SMEM),
        ),
        compiler_params=pltpu.CompilerParams(
            dimension_semantics=("parallel",)),          # 2x on v7x (2 TCs)
        cost_estimate=cost,
    )(z, cov1, cov2, mean1, mean2, x_aug, y)
    return losses[:, 0]                                  # (S,)


def vi_model_forward(x, y, inv_softplus_sigma, mu, noise, cov_factor,
                     subspace_mean, *, dims, eps=1e-6):
    """Original single-sample VIModel.forward semantics (noise: (rank,))."""
    losses = vi_model_forward_sampled(
        x, y, inv_softplus_sigma, mu, noise.reshape(1, -1),
        cov_factor, subspace_mean, dims=dims, eps=eps)
    return losses[0]


def _reference_forward(x, y, isp, mu, noise, cov, mean, dims, eps=1e-6):
    """Pure-JAX reference for correctness checking (single noise sample)."""
    d_in, hidden, d_out = dims
    sigma = _stable_softplus(isp) + eps
    z = mu + noise * sigma
    w = mean + cov.T @ z
    idx = 0
    W1 = w[idx:idx + d_in * hidden].reshape(d_in, hidden); idx += d_in * hidden
    b1 = w[idx:idx + hidden];                              idx += hidden
    W2 = w[idx:idx + hidden * d_out].reshape(hidden, d_out); idx += hidden * d_out
    b2 = w[idx:idx + d_out]
    h = jnp.maximum(x @ W1 + b1, 0.0)
    pred = h @ W2 + b2
    return jnp.mean((pred - y) ** 2)


if __name__ == "__main__":
    # Small, deterministic setup consistent with VIModel.__init__.
    rank = 8
    d_in, hidden, d_out = 16, 32, 8
    batch = 4
    num_params = d_in * hidden + hidden + hidden * d_out + d_out  # 808

    key = jax.random.PRNGKey(0)
    k_x, k_y, k_cov, k_mean, k_noise = jax.random.split(key, 5)

    x = jax.random.normal(k_x, (batch, d_in), jnp.float32)
    y = jax.random.normal(k_y, (batch, d_out), jnp.float32)

    # VIModel parameters (deterministic init, as in __init__):
    mu = jnp.zeros((rank,), jnp.float32)                        # with_mu=True
    inv_softplus_sigma = jnp.full((rank,), -3.0, jnp.float32)   # init_inv_softplus_sigma

    # Subspace (SubspaceModel): w = subspace_mean + cov_factor^T @ z
    cov_factor = 0.1 * jax.random.normal(k_cov, (rank, num_params), jnp.float32)
    subspace_mean = 0.05 * jax.random.normal(k_mean, (num_params,), jnp.float32)

    dims = (d_in, hidden, d_out)

    # --- 1) Original forward semantics: one noise draw -> one scalar loss ---
    noise1 = jax.random.normal(k_noise, (rank,), jnp.float32)
    loss = vi_model_forward(
        x, y, inv_softplus_sigma, mu, noise1, cov_factor, subspace_mean, dims=dims)
    loss = jax.block_until_ready(loss)
    ref = _reference_forward(
        x, y, inv_softplus_sigma, mu, noise1, cov_factor, subspace_mean, dims)
    assert jnp.allclose(loss, ref, rtol=1e-5, atol=1e-5), (loss, ref)

    # --- 2) Monte-Carlo sample grid: S samples in one pallas_call ------------
    S = 4
    noise_s = jax.random.normal(k_noise, (S, rank), jnp.float32)
    losses = vi_model_forward_sampled(
        x, y, inv_softplus_sigma, mu, noise_s, cov_factor, subspace_mean, dims=dims)
    losses = jax.block_until_ready(losses)
    refs = jnp.stack([
        _reference_forward(x, y, inv_softplus_sigma, mu, noise_s[s],
                           cov_factor, subspace_mean, dims)
        for s in range(S)])
    assert jnp.allclose(losses, refs, rtol=1e-5, atol=1e-5), (losses, refs)

    print("KERNEL_OK")
</pallas_src>

<mosaic_0001>
module attributes {stable_mosaic.version = 11 : i64} {
  func.func @_vi_fused_kernel(%arg0: i32, %arg1: memref<1x8xf32, #tpu.memory_space<smem>>, %arg2: memref<8x17x32xf32, #tpu.memory_space<vmem>>, %arg3: memref<8x33x8xf32, #tpu.memory_space<vmem>>, %arg4: memref<17x32xf32, #tpu.memory_space<vmem>>, %arg5: memref<33x8xf32, #tpu.memory_space<vmem>>, %arg6: memref<4x17xf32, #tpu.memory_space<vmem>>, %arg7: memref<4x8xf32, #tpu.memory_space<vmem>>, %arg8: memref<1x1xf32, #tpu.memory_space<smem>>) attributes {dimension_semantics = [#tpu.dimension_semantics<parallel>], iteration_bounds = array<i64: 1>, scalar_prefetch = 1 : i64, scratch_operands = 0 : i64, tpu.core_type = #tpu.core_type<tc>, window_params = [{pipeline_mode = #tpu.pipeline_mode<synchronous>, transform_indices = @transform_0, window_bounds = array<i64: 8, 17, 32>}, {pipeline_mode = #tpu.pipeline_mode<synchronous>, transform_indices = @transform_1, window_bounds = array<i64: 8, 33, 8>}, {pipeline_mode = #tpu.pipeline_mode<synchronous>, transform_indices = @transform_2, window_bounds = array<i64: 17, 32>}, {pipeline_mode = #tpu.pipeline_mode<synchronous>, transform_indices = @transform_3, window_bounds = array<i64: 33, 8>}, {pipeline_mode = #tpu.pipeline_mode<synchronous>, transform_indices = @transform_4, window_bounds = array<i64: 4, 17>}, {pipeline_mode = #tpu.pipeline_mode<synchronous>, transform_indices = @transform_5, window_bounds = array<i64: 4, 8>}, {transform_indices = @transform_6, window_bounds = array<i64: 1, 1>}]} {
    %c0 = arith.constant 0 : index
    %c0_0 = arith.constant 0 : index
    %0 = vector.load %arg4[%c0, %c0_0] : memref<17x32xf32, #tpu.memory_space<vmem>>, vector<17x32xf32>
    %c0_1 = arith.constant 0 : index
    %c0_2 = arith.constant 0 : index
    %1 = vector.load %arg5[%c0_1, %c0_2] : memref<33x8xf32, #tpu.memory_space<vmem>>, vector<33x8xf32>
    %2 = arith.index_cast %arg0 : i32 to index
    %c0_3 = arith.constant 0 : index
    %3 = memref.load %arg1[%2, %c0_3] : memref<1x8xf32, #tpu.memory_space<smem>>
    %c0_4 = arith.constant 0 : index
    %c0_5 = arith.constant 0 : index
    %c0_6 = arith.constant 0 : index
    %4 = vector.load %arg2[%c0_4, %c0_5, %c0_6] : memref<8x17x32xf32, #tpu.memory_space<vmem>>, vector<1x17x32xf32>
    %5 = vector.shape_cast %4 : vector<1x17x32xf32> to vector<17x32xf32>
    %6 = vector.broadcast %3 : f32 to vector<17x32xf32>
    %7 = arith.mulf %6, %5 : vector<17x32xf32>
    %8 = arith.addf %0, %7 : vector<17x32xf32>
    %c0_7 = arith.constant 0 : index
    %c0_8 = arith.constant 0 : index
    %c0_9 = arith.constant 0 : index
    %9 = vector.load %arg3[%c0_7, %c0_8, %c0_9] : memref<8x33x8xf32, #tpu.memory_space<vmem>>, vector<1x33x8xf32>
    %10 = vector.shape_cast %9 : vector<1x33x8xf32> to vector<33x8xf32>
    %11 = vector.broadcast %3 : f32 to vector<33x8xf32>
    %12 = arith.mulf %11, %10 : vector<33x8xf32>
    %13 = arith.addf %1, %12 : vector<33x8xf32>
    %14 = arith.index_cast %arg0 : i32 to index
    %c1 = arith.constant 1 : index
    %15 = memref.load %arg1[%14, %c1] : memref<1x8xf32, #tpu.memory_space<smem>>
    %c1_10 = arith.constant 1 : index
    %c0_11 = arith.constant 0 : index
    %c0_12 = arith.constant 0 : index
    %16 = vector.load %arg2[%c1_10, %c0_11, %c0_12] : memref<8x17x32xf32, #tpu.memory_space<vmem>>, vector<1x17x32xf32>
    %17 = vector.shape_cast %16 : vector<1x17x32xf32> to vector<17x32xf32>
    %18 = vector.broadcast %15 : f32 to vector<17x32xf32>
    %19 = arith.mulf %18, %17 : vector<17x32xf32>
    %20 = arith.addf %8, %19 : vector<17x32xf32>
    %c1_13 = arith.constant 1 : index
    %c0_14 = arith.constant 0 : index
    %c0_15 = arith.constant 0 : index
    %21 = vector.load %arg3[%c1_13, %c0_14, %c0_15] : memref<8x33x8xf32, #tpu.memory_space<vmem>>, vector<1x33x8xf32>
    %22 = vector.shape_cast %21 : vector<1x33x8xf32> to vector<33x8xf32>
    %23 = vector.broadcast %15 : f32 to vector<33x8xf32>
    %24 = arith.mulf %23, %22 : vector<33x8xf32>
    %25 = arith.addf %13, %24 : vector<33x8xf32>
    %26 = arith.index_cast %arg0 : i32 to index
    %c2 = arith.constant 2 : index
    %27 = memref.load %arg1[%26, %c2] : memref<1x8xf32, #tpu.memory_space<smem>>
    %c2_16 = arith.constant 2 : index
    %c0_17 = arith.constant 0 : index
    %c0_18 = arith.constant 0 : index
    %28 = vector.load %arg2[%c2_16, %c0_17, %c0_18] : memref<8x17x32xf32, #tpu.memory_space<vmem>>, vector<1x17x32xf32>
    %29 = vector.shape_cast %28 : vector<1x17x32xf32> to vector<17x32xf32>
    %30 = vector.broadcast %27 : f32 to vector<17x32xf32>
    %31 = arith.mulf %30, %29 : vector<17x32xf32>
    %32 = arith.addf %20, %31 : vector<17x32xf32>
    %c2_19 = arith.constant 2 : index
    %c0_20 = arith.constant 0 : index
    %c0_21 = arith.constant 0 : index
    %33 = vector.load %arg3[%c2_19, %c0_20, %c0_21] : memref<8x33x8xf32, #tpu.memory_space<vmem>>, vector<1x33x8xf32>
    %34 = vector.shape_cast %33 : vector<1x33x8xf32> to vector<33x8xf32>
    %35 = vector.broadcast %27 : f32 to vector<33x8xf32>
    %36 = arith.mulf %35, %34 : vector<33x8xf32>
    %37 = arith.addf %25, %36 : vector<33x8xf32>
    %38 = arith.index_cast %arg0 : i32 to index
    %c3 = arith.constant 3 : index
    %39 = memref.load %arg1[%38, %c3] : memref<1x8xf32, #tpu.memory_space<smem>>
    %c3_22 = arith.constant 3 : index
    %c0_23 = arith.constant 0 : index
    %c0_24 = arith.constant 0 : index
    %40 = vector.load %arg2[%c3_22, %c0_23, %c0_24] : memref<8x17x32xf32, #tpu.memory_space<vmem>>, vector<1x17x32xf32>
    %41 = vector.shape_cast %40 : vector<1x17x32xf32> to vector<17x32xf32>
    %42 = vector.broadcast %39 : f32 to vector<17x32xf32>
    %43 = arith.mulf %42, %41 : vector<17x32xf32>
    %44 = arith.addf %32, %43 : vector<17x32xf32>
    %c3_25 = arith.constant 3 : index
    %c0_26 = arith.constant 0 : index
    %c0_27 = arith.constant 0 : index
    %45 = vector.load %arg3[%c3_25, %c0_26, %c0_27] : memref<8x33x8xf32, #tpu.memory_space<vmem>>, vector<1x33x8xf32>
    %46 = vector.shape_cast %45 : vector<1x33x8xf32> to vector<33x8xf32>
    %47 = vector.broadcast %39 : f32 to vector<33x8xf32>
    %48 = arith.mulf %47, %46 : vector<33x8xf32>
    %49 = arith.addf %37, %48 : vector<33x8xf32>
    %50 = arith.index_cast %arg0 : i32 to index
    %c4 = arith.constant 4 : index
    %51 = memref.load %arg1[%50, %c4] : memref<1x8xf32, #tpu.memory_space<smem>>
    %c4_28 = arith.constant 4 : index
    %c0_29 = arith.constant 0 : index
    %c0_30 = arith.constant 0 : index
    %52 = vector.load %arg2[%c4_28, %c0_29, %c0_30] : memref<8x17x32xf32, #tpu.memory_space<vmem>>, vector<1x17x32xf32>
    %53 = vector.shape_cast %52 : vector<1x17x32xf32> to vector<17x32xf32>
    %54 = vector.broadcast %51 : f32 to vector<17x32xf32>
    %55 = arith.mulf %54, %53 : vector<17x32xf32>
    %56 = arith.addf %44, %55 : vector<17x32xf32>
    %c4_31 = arith.constant 4 : index
    %c0_32 = arith.constant 0 : index
    %c0_33 = arith.constant 0 : index
    %57 = vector.load %arg3[%c4_31, %c0_32, %c0_33] : memref<8x33x8xf32, #tpu.memory_space<vmem>>, vector<1x33x8xf32>
    %58 = vector.shape_cast %57 : vector<1x33x8xf32> to vector<33x8xf32>
    %59 = vector.broadcast %51 : f32 to vector<33x8xf32>
    %60 = arith.mulf %59, %58 : vector<33x8xf32>
    %61 = arith.addf %49, %60 : vector<33x8xf32>
    %62 = arith.index_cast %arg0 : i32 to index
    %c5 = arith.constant 5 : index
    %63 = memref.load %arg1[%62, %c5] : memref<1x8xf32, #tpu.memory_space<smem>>
    %c5_34 = arith.constant 5 : index
    %c0_35 = arith.constant 0 : index
    %c0_36 = arith.constant 0 : index
    %64 = vector.load %arg2[%c5_34, %c0_35, %c0_36] : memref<8x17x32xf32, #tpu.memory_space<vmem>>, vector<1x17x32xf32>
    %65 = vector.shape_cast %64 : vector<1x17x32xf32> to vector<17x32xf32>
    %66 = vector.broadcast %63 : f32 to vector<17x32xf32>
    %67 = arith.mulf %66, %65 : vector<17x32xf32>
    %68 = arith.addf %56, %67 : vector<17x32xf32>
    %c5_37 = arith.constant 5 : index
    %c0_38 = arith.constant 0 : index
    %c0_39 = arith.constant 0 : index
    %69 = vector.load %arg3[%c5_37, %c0_38, %c0_39] : memref<8x33x8xf32, #tpu.memory_space<vmem>>, vector<1x33x8xf32>
    %70 = vector.shape_cast %69 : vector<1x33x8xf32> to vector<33x8xf32>
    %71 = vector.broadcast %63 : f32 to vector<33x8xf32>
    %72 = arith.mulf %71, %70 : vector<33x8xf32>
    %73 = arith.addf %61, %72 : vector<33x8xf32>
    %74 = arith.index_cast %arg0 : i32 to index
    %c6 = arith.constant 6 : index
    %75 = memref.load %arg1[%74, %c6] : memref<1x8xf32, #tpu.memory_space<smem>>
    %c6_40 = arith.constant 6 : index
    %c0_41 = arith.constant 0 : index
    %c0_42 = arith.constant 0 : index
    %76 = vector.load %arg2[%c6_40, %c0_41, %c0_42] : memref<8x17x32xf32, #tpu.memory_space<vmem>>, vector<1x17x32xf32>
    %77 = vector.shape_cast %76 : vector<1x17x32xf32> to vector<17x32xf32>
    %78 = vector.broadcast %75 : f32 to vector<17x32xf32>
    %79 = arith.mulf %78, %77 : vector<17x32xf32>
    %80 = arith.addf %68, %79 : vector<17x32xf32>
    %c6_43 = arith.constant 6 : index
    %c0_44 = arith.constant 0 : index
    %c0_45 = arith.constant 0 : index
    %81 = vector.load %arg3[%c6_43, %c0_44, %c0_45] : memref<8x33x8xf32, #tpu.memory_space<vmem>>, vector<1x33x8xf32>
    %82 = vector.shape_cast %81 : vector<1x33x8xf32> to vector<33x8xf32>
    %83 = vector.broadcast %75 : f32 to vector<33x8xf32>
    %84 = arith.mulf %83, %82 : vector<33x8xf32>
    %85 = arith.addf %73, %84 : vector<33x8xf32>
    %86 = arith.index_cast %arg0 : i32 to index
    %c7 = arith.constant 7 : index
    %87 = memref.load %arg1[%86, %c7] : memref<1x8xf32, #tpu.memory_space<smem>>
    %c7_46 = arith.constant 7 : index
    %c0_47 = arith.constant 0 : index
    %c0_48 = arith.constant 0 : index
    %88 = vector.load %arg2[%c7_46, %c0_47, %c0_48] : memref<8x17x32xf32, #tpu.memory_space<vmem>>, vector<1x17x32xf32>
    %89 = vector.shape_cast %88 : vector<1x17x32xf32> to vector<17x32xf32>
    %90 = vector.broadcast %87 : f32 to vector<17x32xf32>
    %91 = arith.mulf %90, %89 : vector<17x32xf32>
    %92 = arith.addf %80, %91 : vector<17x32xf32>
    %c7_49 = arith.constant 7 : index
    %c0_50 = arith.constant 0 : index
    %c0_51 = arith.constant 0 : index
    %93 = vector.load %arg3[%c7_49, %c0_50, %c0_51] : memref<8x33x8xf32, #tpu.memory_space<vmem>>, vector<1x33x8xf32>
    %94 = vector.shape_cast %93 : vector<1x33x8xf32> to vector<33x8xf32>
    %95 = vector.broadcast %87 : f32 to vector<33x8xf32>
    %96 = arith.mulf %95, %94 : vector<33x8xf32>
    %97 = arith.addf %85, %96 : vector<33x8xf32>
    %c0_52 = arith.constant 0 : index
    %c0_53 = arith.constant 0 : index
    %98 = vector.load %arg6[%c0_52, %c0_53] : memref<4x17xf32, #tpu.memory_space<vmem>>, vector<4x17xf32>
    %cst = arith.constant dense<0.000000e+00> : vector<4x32xf32>
    %99 = tpu.matmul %98, %92, %cst {dimension_numbers = #tpu.dot_dimension_numbers<[1], [0], [0], [1], [0, 0, 1, 1], [], []>} : vector<4x17xf32>, vector<17x32xf32>, vector<4x32xf32> -> vector<4x32xf32>
    %cst_54 = arith.constant 0.000000e+00 : f32
    %100 = vector.broadcast %cst_54 : f32 to vector<4x32xf32>
    %101 = arith.maximumf %99, %100 : vector<4x32xf32>
    %102 = vector.extract_strided_slice %97 {offsets = [0, 0], sizes = [32, 8], strides = [1, 1]} : vector<33x8xf32> to vector<32x8xf32>
    %cst_55 = arith.constant dense<0.000000e+00> : vector<4x8xf32>
    %103 = tpu.matmul %101, %102, %cst_55 {dimension_numbers = #tpu.dot_dimension_numbers<[1], [0], [0], [1], [0, 0, 1, 1], [], []>} : vector<4x32xf32>, vector<32x8xf32>, vector<4x8xf32> -> vector<4x8xf32>
    %104 = vector.extract_strided_slice %97 {offsets = [32, 0], sizes = [1, 8], strides = [1, 1]} : vector<33x8xf32> to vector<1x8xf32>
    %105 = vector.broadcast %104 : vector<1x8xf32> to vector<4x8xf32>
    %106 = arith.addf %103, %105 : vector<4x8xf32>
    %c0_56 = arith.constant 0 : index
    %c0_57 = arith.constant 0 : index
    %107 = vector.load %arg7[%c0_56, %c0_57] : memref<4x8xf32, #tpu.memory_space<vmem>>, vector<4x8xf32>
    %108 = arith.subf %106, %107 : vector<4x8xf32>
    %109 = arith.mulf %108, %108 : vector<4x8xf32>
    %110 = vector.shape_cast %109 : vector<4x8xf32> to vector<1x4x8xf32>
    %cst_58 = arith.constant dense<0.000000e+00> : vector<1xf32>
    %111 = vector.multi_reduction <add>, %110, %cst_58 [1, 2] : vector<1x4x8xf32> to vector<1xf32>
    %112 = vector.shape_cast %111 : vector<1xf32> to vector<1x1x1xf32>
    %113 = vector.extract %112[0, 0, 0] : f32 from vector<1x1x1xf32>
    %cst_59 = arith.constant 3.125000e-02 : f32
    %114 = arith.mulf %113, %cst_59 : f32
    %c0_60 = arith.constant 0 : index
    %c0_61 = arith.constant 0 : index
    %115 = memref.load %arg8[%c0_60, %c0_61] : memref<1x1xf32, #tpu.memory_space<smem>>
    memref.store %114, %arg8[%c0_60, %c0_61] : memref<1x1xf32, #tpu.memory_space<smem>>
    return
  }
  func.func @transform_0(%arg0: i32, %arg1: memref<1x8xf32, #tpu.memory_space<smem>>) -> (i32, i32, i32) {
    %c0_i32 = arith.constant 0 : i32
    %c0_i32_0 = arith.constant 0 : i32
    %c0_i32_1 = arith.constant 0 : i32
    %c0_i32_2 = arith.constant 0 : i32
    return %c0_i32, %c0_i32_0, %c0_i32_1 : i32, i32, i32
  }
  func.func @transform_1(%arg0: i32, %arg1: memref<1x8xf32, #tpu.memory_space<smem>>) -> (i32, i32, i32) {
    %c0_i32 = arith.constant 0 : i32
    %c0_i32_0 = arith.constant 0 : i32
    %c0_i32_1 = arith.constant 0 : i32
    %c0_i32_2 = arith.constant 0 : i32
    return %c0_i32, %c0_i32_0, %c0_i32_1 : i32, i32, i32
  }
  func.func @transform_2(%arg0: i32, %arg1: memref<1x8xf32, #tpu.memory_space<smem>>) -> (i32, i32) {
    %c0_i32 = arith.constant 0 : i32
    %c0_i32_0 = arith.constant 0 : i32
    %c0_i32_1 = arith.constant 0 : i32
    return %c0_i32, %c0_i32_0 : i32, i32
  }
  func.func @transform_3(%arg0: i32, %arg1: memref<1x8xf32, #tpu.memory_space<smem>>) -> (i32, i32) {
    %c0_i32 = arith.constant 0 : i32
    %c0_i32_0 = arith.constant 0 : i32
    %c0_i32_1 = arith.constant 0 : i32
    return %c0_i32, %c0_i32_0 : i32, i32
  }
  func.func @transform_4(%arg0: i32, %arg1: memref<1x8xf32, #tpu.memory_space<smem>>) -> (i32, i32) {
    %c0_i32 = arith.constant 0 : i32
    %c0_i32_0 = arith.constant 0 : i32
    %c0_i32_1 = arith.constant 0 : i32
    return %c0_i32, %c0_i32_0 : i32, i32
  }
  func.func @transform_5(%arg0: i32, %arg1: memref<1x8xf32, #tpu.memory_space<smem>>) -> (i32, i32) {
    %c0_i32 = arith.constant 0 : i32
    %c0_i32_0 = arith.constant 0 : i32
    %c0_i32_1 = arith.constant 0 : i32
    return %c0_i32, %c0_i32_0 : i32, i32
  }
  func.func @transform_6(%arg0: i32, %arg1: memref<1x8xf32, #tpu.memory_space<smem>>) -> (i32, i32) {
    %c0_i32 = arith.constant 0 : i32
    %c0_i32_0 = arith.constant 0 : i32
    return %arg0, %c0_i32 : i32, i32
  }
}

</mosaic_0001>

<llo_original>
// kernel: vi_model_forward_sampled.1
$region0: #{vi_model_forward_sampled.1}
  #allocation0 [shape = 'u32[]', space=smem, size = 0x4, offset = 0x4, fixed_abs, tag = 'smem constant byte address 0x4 - core index']
  #allocation1 [shape = 'u32[72,128]{1,0:T(1,128)}', space=vmem, size = 0x9000, scoped, tag = 'internal scratch']
  #allocation2 [shape = 's32[1]{0}', space=sflag, size = 0x4, scoped, tag = 'scoped memory for vi_model_forward_sampled.1']
  #allocation3 [shape = 'u8[512]{0}', space=smem, size = 0x200, scoped, tag = 'prefetched SMEM operand 0']
  %s0 = inlined_call_operand.vmem [shape: f32[1,8], index: 0, kind: input, shape index: {}]
  %s1 = inlined_call_operand.vmem [shape: f32[8,17,32], index: 1, kind: input, shape index: {}]
  %s2 = inlined_call_operand.vmem [shape: f32[8,33,8], index: 2, kind: input, shape index: {}]
  %s3 = inlined_call_operand.vmem [shape: f32[17,32], index: 3, kind: input, shape index: {}]
  %s4 = inlined_call_operand.vmem [shape: f32[33,8], index: 4, kind: input, shape index: {}]
  %s5 = inlined_call_operand.vmem [shape: f32[4,17], index: 5, kind: input, shape index: {}]
  %s6 = inlined_call_operand.vmem [shape: f32[4,8], index: 6, kind: input, shape index: {}]
  %s7 = inlined_call_operand.hbm [shape: f32[1,1], index: 7, kind: output, shape index: {}]
  %s8 = sld [smem:[#allocation0]]
  $region34: #{vi_model_forward_sampled.1} parent=0
    _
  %s10 = ssub.s32 1, %s8
  %s11 = scalar_select 0, %s10, %s8
  %s13 = sshll.u32 %s0, 4
  %s14 = int_to_ptr.vmem [resolvable:$true] %s13
  %16 = dma.vmem_to_smem %s14, 16, [#allocation3], [#allocation2]
  %18 = dma.done [#allocation2], 16
  %19 = sfence
  $region1: #{vi_model_forward_sampled.1} parent=0
    #allocation4 [shape = 'u8[512]{0}', space=smem, size = 0x200, scoped, tag = 'output window, operand 0, single buffered']
    #allocation5 [shape = 's32[1]{0}', space=sflag, size = 0x4, scoped, tag = 'scoped memory for vi_model_forward_sampled.1']
    %20 = vsyncpa [#allocation5], 0
    // Predicated region
    $region2: #{vi_model_forward_sampled.1} parent=1 // pred_check
      _
    $region3: #{vi_model_forward_sampled.1} parent=1 // pred_check_branch
      %22 = sbr.rel (0) target = $region5
    $region4: #{vi_model_forward_sampled.1} parent=1 // pred_region
      _
    $region5: #{vi_model_forward_sampled.1} parent=1 // pred_fallthru
      _
    // Predicated region
    $region6: #{vi_model_forward_sampled.1} parent=1 // pred_check
      _
    $region7: #{vi_model_forward_sampled.1} parent=1 // pred_check_branch
      %24 = sbr.rel (0) target = $region9
    $region8: #{vi_model_forward_sampled.1} parent=1 // pred_region
      _
    $region9: #{vi_model_forward_sampled.1} parent=1 // pred_fallthru
      _
    // Predicated region
    $region10: #{vi_model_forward_sampled.1} parent=1 // pred_check
      _
    $region11: #{vi_model_forward_sampled.1} parent=1 // pred_check_branch
      %26 = sbr.rel (0) target = $region13
    $region12: #{vi_model_forward_sampled.1} parent=1 // pred_region
      _
    $region13: #{vi_model_forward_sampled.1} parent=1 // pred_fallthru
      _
    // Predicated region
    $region14: #{vi_model_forward_sampled.1} parent=1 // pred_check
      _
    $region15: #{vi_model_forward_sampled.1} parent=1 // pred_check_branch
      %28 = sbr.rel (0) target = $region17
    $region16: #{vi_model_forward_sampled.1} parent=1 // pred_region
      _
    $region17: #{vi_model_forward_sampled.1} parent=1 // pred_fallthru
      _
    // Predicated region
    $region18: #{vi_model_forward_sampled.1} parent=1 // pred_check
      _
    $region19: #{vi_model_forward_sampled.1} parent=1 // pred_check_branch
      %30 = sbr.rel (0) target = $region21
    $region20: #{vi_model_forward_sampled.1} parent=1 // pred_region
      _
    $region21: #{vi_model_forward_sampled.1} parent=1 // pred_fallthru
      _
    // Predicated region
    $region22: #{vi_model_forward_sampled.1} parent=1 // pred_check
      _
    $region23: #{vi_model_forward_sampled.1} parent=1 // pred_check_branch
      %32 = sbr.rel (0) target = $region25
    $region24: #{vi_model_forward_sampled.1} parent=1 // pred_region
      _
    $region25: #{vi_model_forward_sampled.1} parent=1 // pred_fallthru
      _
    %v33 = vld [vmem:[%s3] sm:$0xff]
    %v34 = vld [vmem:[%s3 + $0x8] sm:$0xff]
    %v35 = vld [vmem:[%s3 + $0x10] sm:$0x1]
    %v36 = vld [vmem:[%s4] sm:$0xff]
    %v37 = vld [vmem:[%s4 + $0x8] sm:$0xff]
    %v38 = vld [vmem:[%s4 + $0x10] sm:$0xff]
    %v39 = vld [vmem:[%s4 + $0x18] sm:$0xff]
    %v40 = vld [vmem:[%s4 + $0x20] sm:$0x1]
    %s41 = smul.u32 0, 128
    %s42 = sld [smem:[#allocation3 + %s41]]
    %v43 = vld [vmem:[%s1] sm:$0xff]
    %v44 = vld [vmem:[%s1 + $0x8] sm:$0xff]
    %v45 = vld [vmem:[%s1 + $0x10] sm:$0x1]
    %v46 = vstv %s42
    %v47 = vmul.f32 %v46, %v43
    %v48 = vmul.f32 %v46, %v44
    %v49 = vmul.f32 %v46, %v45
    %v50 = vadd.f32 %v33, %v47
    %v51 = vadd.f32 %v34, %v48
    %v52 = vadd.f32 %v35, %v49
    %v53 = vld [vmem:[%s2] sm:$0xff]
    %v54 = vld [vmem:[%s2 + $0x8] sm:$0xff]
    %v55 = vld [vmem:[%s2 + $0x10] sm:$0xff]
    %v56 = vld [vmem:[%s2 + $0x18] sm:$0xff]
    %v57 = vld [vmem:[%s2 + $0x20] sm:$0x1]
    %v58 = vmul.f32 %v46, %v53
    %v59 = vmul.f32 %v46, %v54
    %v60 = vmul.f32 %v46, %v55
    %v61 = vmul.f32 %v46, %v56
    %v62 = vmul.f32 %v46, %v57
    %v63 = vadd.f32 %v36, %v58
    %v64 = vadd.f32 %v37, %v59
    %v65 = vadd.f32 %v38, %v60
    %v66 = vadd.f32 %v39, %v61
    %v67 = vadd.f32 %v40, %v62
    %s68 = sadd.s32 %s41, 1
    %s69 = sld [smem:[#allocation3 + %s68]]
    %s70 = scalar_lea.vmem %s1, 24
    %v71 = vld [vmem:[%s70] sm:$0xff]
    %v72 = vld [vmem:[%s70 + $0x8] sm:$0xff]
    %v73 = vld [vmem:[%s70 + $0x10] sm:$0x1]
    %v74 = vstv %s69
    %v75 = vmul.f32 %v74, %v71
    %v76 = vmul.f32 %v74, %v72
    %v77 = vmul.f32 %v74, %v73
    %v78 = vadd.f32 %v50, %v75
    %v79 = vadd.f32 %v51, %v76
    %v80 = vadd.f32 %v52, %v77
    %s81 = scalar_lea.vmem %s2, 40
    %v82 = vld [vmem:[%s81] sm:$0xff]
    %v83 = vld [vmem:[%s81 + $0x8] sm:$0xff]
    %v84 = vld [vmem:[%s81 + $0x10] sm:$0xff]
    %v85 = vld [vmem:[%s81 + $0x18] sm:$0xff]
    %v86 = vld [vmem:[%s81 + $0x20] sm:$0x1]
    %v87 = vmul.f32 %v74, %v82
    %v88 = vmul.f32 %v74, %v83
    %v89 = vmul.f32 %v74, %v84
    %v90 = vmul.f32 %v74, %v85
    %v91 = vmul.f32 %v74, %v86
    %v92 = vadd.f32 %v63, %v87
    %v93 = vadd.f32 %v64, %v88
    %v94 = vadd.f32 %v65, %v89
    %v95 = vadd.f32 %v66, %v90
    %v96 = vadd.f32 %v67, %v91
    %s97 = sadd.s32 %s41, 2
    %s98 = sld [smem:[#allocation3 + %s97]]
    %s99 = scalar_lea.vmem %s1, 48
    %v100 = vld [vmem:[%s99] sm:$0xff]
    %v101 = vld [vmem:[%s99 + $0x8] sm:$0xff]
    %v102 = vld [vmem:[%s99 + $0x10] sm:$0x1]
    %v103 = vstv %s98
    %v104 = vmul.f32 %v103, %v100
    %v105 = vmul.f32 %v103, %v101
    %v106 = vmul.f32 %v103, %v102
    %v107 = vadd.f32 %v78, %v104
    %v108 = vadd.f32 %v79, %v105
    %v109 = vadd.f32 %v80, %v106
    %s110 = scalar_lea.vmem %s2, 80
    %v111 = vld [vmem:[%s110] sm:$0xff]
    %v112 = vld [vmem:[%s110 + $0x8] sm:$0xff]
    %v113 = vld [vmem:[%s110 + $0x10] sm:$0xff]
    %v114 = vld [vmem:[%s110 + $0x18] sm:$0xff]
    %v115 = vld [vmem:[%s110 + $0x20] sm:$0x1]
    %v116 = vmul.f32 %v103, %v111
    %v117 = vmul.f32 %v103, %v112
    %v118 = vmul.f32 %v103, %v113
    %v119 = vmul.f32 %v103, %v114
    %v120 = vmul.f32 %v103, %v115
    %v121 = vadd.f32 %v92, %v116
    %v122 = vadd.f32 %v93, %v117
    %v123 = vadd.f32 %v94, %v118
    %v124 = vadd.f32 %v95, %v119
    %v125 = vadd.f32 %v96, %v120
    %s126 = sadd.s32 %s41, 3
    %s127 = sld [smem:[#allocation3 + %s126]]
    %s128 = scalar_lea.vmem %s1, 72
    %v129 = vld [vmem:[%s128] sm:$0xff]
    %v130 = vld [vmem:[%s128 + $0x8] sm:$0xff]
    %v131 = vld [vmem:[%s128 + $0x10] sm:$0x1]
    %v132 = vstv %s127
    %v133 = vmul.f32 %v132, %v129
    %v134 = vmul.f32 %v132, %v130
    %v135 = vmul.f32 %v132, %v131
    %v136 = vadd.f32 %v107, %v133
    %v137 = vadd.f32 %v108, %v134
    %v138 = vadd.f32 %v109, %v135
    %s139 = scalar_lea.vmem %s2, 120
    %v140 = vld [vmem:[%s139] sm:$0xff]
    %v141 = vld [vmem:[%s139 + $0x8] sm:$0xff]
    %v142 = vld [vmem:[%s139 + $0x10] sm:$0xff]
    %v143 = vld [vmem:[%s139 + $0x18] sm:$0xff]
    %v144 = vld [vmem:[%s139 + $0x20] sm:$0x1]
    %v145 = vmul.f32 %v132, %v140
    %v146 = vmul.f32 %v132, %v141
    %v147 = vmul.f32 %v132, %v142
    %v148 = vmul.f32 %v132, %v143
    %v149 = vmul.f32 %v132, %v144
    %v150 = vadd.f32 %v121, %v145
    %v151 = vadd.f32 %v122, %v146
    %v152 = vadd.f32 %v123, %v147
    %v153 = vadd.f32 %v124, %v148
    %v154 = vadd.f32 %v125, %v149
    %s155 = sadd.s32 %s41, 4
    %s156 = sld [smem:[#allocation3 + %s155]]
    %s157 = scalar_lea.vmem %s1, 96
    %v158 = vld [vmem:[%s157] sm:$0xff]
    %v159 = vld [vmem:[%s157 + $0x8] sm:$0xff]
    %v160 = vld [vmem:[%s157 + $0x10] sm:$0x1]
    %v161 = vstv %s156
    %v162 = vmul.f32 %v161, %v158
    %v163 = vmul.f32 %v161, %v159
    %v164 = vmul.f32 %v161, %v160
    %v165 = vadd.f32 %v136, %v162
    %v166 = vadd.f32 %v137, %v163
    %v167 = vadd.f32 %v138, %v164
    %s168 = scalar_lea.vmem %s2, 160
    %v169 = vld [vmem:[%s168] sm:$0xff]
    %v170 = vld [vmem:[%s168 + $0x8] sm:$0xff]
    %v171 = vld [vmem:[%s168 + $0x10] sm:$0xff]
    %v172 = vld [vmem:[%s168 + $0x18] sm:$0xff]
    %v173 = vld [vmem:[%s168 + $0x20] sm:$0x1]
    %v174 = vmul.f32 %v161, %v169
    %v175 = vmul.f32 %v161, %v170
    %v176 = vmul.f32 %v161, %v171
    %v177 = vmul.f32 %v161, %v172
    %v178 = vmul.f32 %v161, %v173
    %v179 = vadd.f32 %v150, %v174
    %v180 = vadd.f32 %v151, %v175
    %v181 = vadd.f32 %v152, %v176
    %v182 = vadd.f32 %v153, %v177
    %v183 = vadd.f32 %v154, %v178
    %s184 = sadd.s32 %s41, 5
    %s185 = sld [smem:[#allocation3 + %s184]]
    %s186 = scalar_lea.vmem %s1, 120
    %v187 = vld [vmem:[%s186] sm:$0xff]
    %v188 = vld [vmem:[%s186 + $0x8] sm:$0xff]
    %v189 = vld [vmem:[%s186 + $0x10] sm:$0x1]
    %v190 = vstv %s185
    %v191 = vmul.f32 %v190, %v187
    %v192 = vmul.f32 %v190, %v188
    %v193 = vmul.f32 %v190, %v189
    %v194 = vadd.f32 %v165, %v191
    %v195 = vadd.f32 %v166, %v192
    %v196 = vadd.f32 %v167, %v193
    %s197 = scalar_lea.vmem %s2, 200
    %v198 = vld [vmem:[%s197] sm:$0xff]
    %v199 = vld [vmem:[%s197 + $0x8] sm:$0xff]
    %v200 = vld [vmem:[%s197 + $0x10] sm:$0xff]
    %v201 = vld [vmem:[%s197 + $0x18] sm:$0xff]
    %v202 = vld [vmem:[%s197 + $0x20] sm:$0x1]
    %v203 = vmul.f32 %v190, %v198
    %v204 = vmul.f32 %v190, %v199
    %v205 = vmul.f32 %v190, %v200
    %v206 = vmul.f32 %v190, %v201
    %v207 = vmul.f32 %v190, %v202
    %v208 = vadd.f32 %v179, %v203
    %v209 = vadd.f32 %v180, %v204
    %v210 = vadd.f32 %v181, %v205
    %v211 = vadd.f32 %v182, %v206
    %v212 = vadd.f32 %v183, %v207
    %s213 = sadd.s32 %s41, 6
    %s214 = sld [smem:[#allocation3 + %s213]]
    %s215 = scalar_lea.vmem %s1, 144
    %v216 = vld [vmem:[%s215] sm:$0xff]
    %v217 = vld [vmem:[%s215 + $0x8] sm:$0xff]
    %v218 = vld [vmem:[%s215 + $0x10] sm:$0x1]
    %v219 = vstv %s214
    %v220 = vmul.f32 %v219, %v216
    %v221 = vmul.f32 %v219, %v217
    %v222 = vmul.f32 %v219, %v218
    %v223 = vadd.f32 %v194, %v220
    %v224 = vadd.f32 %v195, %v221
    %v225 = vadd.f32 %v196, %v222
    %s226 = scalar_lea.vmem %s2, 240
    %v227 = vld [vmem:[%s226] sm:$0xff]
    %v228 = vld [vmem:[%s226 + $0x8] sm:$0xff]
    %v229 = vld [vmem:[%s226 + $0x10] sm:$0xff]
    %v230 = vld [vmem:[%s226 + $0x18] sm:$0xff]
    %v231 = vld [vmem:[%s226 + $0x20] sm:$0x1]
    %v232 = vmul.f32 %v219, %v227
    %v233 = vmul.f32 %v219, %v228
    %v234 = vmul.f32 %v219, %v229
    %v235 = vmul.f32 %v219, %v230
    %v236 = vmul.f32 %v219, %v231
    %v237 = vadd.f32 %v208, %v232
    %v238 = vadd.f32 %v209, %v233
    %v239 = vadd.f32 %v210, %v234
    %v240 = vadd.f32 %v211, %v235
    %v241 = vadd.f32 %v212, %v236
    %s242 = sadd.s32 %s41, 7
    %s243 = sld [smem:[#allocation3 + %s242]]
    %s244 = scalar_lea.vmem %s1, 168
    %v245 = vld [vmem:[%s244] sm:$0xff]
    %v246 = vld [vmem:[%s244 + $0x8] sm:$0xff]
    %v247 = vld [vmem:[%s244 + $0x10] sm:$0x1]
    %v248 = vstv %s243
    %v249 = vmul.f32 %v248, %v245
    %v250 = vmul.f32 %v248, %v246
    %v251 = vmul.f32 %v248, %v247
    %v252 = vadd.f32 %v223, %v249
    %v253 = vadd.f32 %v224, %v250
    %v254 = vadd.f32 %v225, %v251
    %s255 = scalar_lea.vmem %s2, 280
    %v256 = vld [vmem:[%s255] sm:$0xff]
    %v257 = vld [vmem:[%s255 + $0x8] sm:$0xff]
    %v258 = vld [vmem:[%s255 + $0x10] sm:$0xff]
    %v259 = vld [vmem:[%s255 + $0x18] sm:$0xff]
    %v260 = vld [vmem:[%s255 + $0x20] sm:$0x1]
    %v261 = vmul.f32 %v248, %v256
    %v262 = vmul.f32 %v248, %v257
    %v263 = vmul.f32 %v248, %v258
    %v264 = vmul.f32 %v248, %v259
    %v265 = vmul.f32 %v248, %v260
    %v266 = vadd.f32 %v237, %v261
    %v267 = vadd.f32 %v238, %v262
    %v268 = vadd.f32 %v239, %v263
    %v269 = vadd.f32 %v240, %v264
    %v270 = vadd.f32 %v241, %v265
    %v271 = vld [vmem:[%s5] sm:$0xf]
    %vm272 = vcmask 138240
    %v274 = vsel %vm272, %v271, 0
    %vm276 = vcmask 1040384
    %v278 = vsel %vm276, %v254, 0
    %280 = vmatpush.msra.mxu0 0.0
    %281 = vmatpush.msra.mxu0 0.0
    %282 = vmatpush.msra.mxu0 0.0
    %283 = vmatpush.msra.mxu0 0.0
    %284 = vmatpush.msra.mxu0 0.0
    %285 = vmatpush.msra.mxu0 0.0
    %286 = vmatpush.msra.mxu0 0.0
    %287 = vmatpush.msra.mxu0 0.0
    %288 = vmatpush.msra.mxu0 0.0
    %289 = vmatpush.msra.mxu0 0.0
    %290 = vmatpush.msra.mxu0 0.0
    %291 = vmatpush.msra.mxu0 0.0
    %292 = vmatpush.msra.mxu0 0.0
    %293 = vmatpush.msra.mxu0 %v278
    %294 = vmatpush.msra.mxu0 %v253
    %295 = vmatpush.msra.mxu0 %v252
    %296 = vmatmul.f32.gmra.mxu0 %v274
    %v297 = vpop.f32.mrf.mxu0
    %v298 = vadd.f32 0.0, %v297
    %299 = vdwg.mxu0
    %v300 = vmax.f32 %v298, 0.0
    %v301 = vperm.slane %v270, 0
    %vm302 = vcmask 261120
    %v304 = vsel %vm302, %v300, 0
    %306 = vmatpush.msra.mxu0 0.0
    %307 = vmatpush.msra.mxu0 0.0
    %308 = vmatpush.msra.mxu0 0.0
    %309 = vmatpush.msra.mxu0 0.0
    %310 = vmatpush.msra.mxu0 0.0
    %311 = vmatpush.msra.mxu0 0.0
    %312 = vmatpush.msra.mxu0 0.0
    %313 = vmatpush.msra.mxu0 0.0
    %314 = vmatpush.msra.mxu0 0.0
    %315 = vmatpush.msra.mxu0 0.0
    %316 = vmatpush.msra.mxu0 0.0
    %317 = vmatpush.msra.mxu0 0.0
    %318 = vmatpush.msra.mxu0 %v269
    %319 = vmatpush.msra.mxu0 %v268
    %320 = vmatpush.msra.mxu0 %v267
    %321 = vmatpush.msra.mxu0 %v266
    %322 = vmatmul.f32.gmra.mxu0 %v304
    %v323 = vpop.f32.mrf.mxu0
    %v324 = vadd.f32 %v301, %v323
    %325 = vdwg.mxu0
    %v326 = vld [vmem:[%s6] sm:$0xf]
    %v327 = vsub.f32 %v324, %v326
    %v328 = vmul.f32 %v327, %v327
    %vm329 = vcmask 60416
    %v330 = vsel %vm329, %v328, 0.0
    %331 = vadd.xlane.f32.xlu0 %v330
    %v332 = vpop.xlane.xlu0 %331
    %v333 = vrot.slane %v332, 4
    %v334 = vadd.f32 %v332, %v333
    %v335 = vrot.slane %v334, 2
    %v336 = vadd.f32 %v334, %v335
    %v337 = vrot.slane %v336, 1
    %v338 = vadd.f32 %v336, %v337
    %s339 = vtos %v338
    %s340 = smul.f32 %s339, 0.03125
    %s341 = scalar_lea.smem [#allocation4], 0
    %342 = sst [smem:[%s341]] %s340
    // Predicated region
    $region26: #{vi_model_forward_sampled.1} parent=1 // pred_check
      _
    $region27: #{vi_model_forward_sampled.1} parent=1 // pred_check_branch
      %344 = sbr.rel (0) target = $region29
    $region28: #{vi_model_forward_sampled.1} parent=1 // pred_region
      %346 = vsyncadd [#allocation5], 0
      %s348 = sshll.u32 %s7, 4
      %s349 = int_to_ptr.hbm [resolvable:$true] %s348
      %351 = dma.smem_to_hbm [#allocation4], 16, %s349, [#allocation5]
    $region29: #{vi_model_forward_sampled.1} parent=1 // pred_fallthru
      _
    // Predicated region
    $region30: #{vi_model_forward_sampled.1} parent=1 // pred_check
      _
    $region31: #{vi_model_forward_sampled.1} parent=1 // pred_check_branch
      %353 = sbr.rel (0) target = $region33
    $region32: #{vi_model_forward_sampled.1} parent=1 // pred_region
      %355 = dma.done [#allocation5], 16
    $region33: #{vi_model_forward_sampled.1} parent=1 // pred_fallthru
      _
    %356 = sfence
    %357 = vsyncpa [#allocation5], 1

</llo_original>
